<compile_context>
chip_gen: v5e
topology: v5e:2x2
jax: 0.10.0
libtpu: 0.0.40
codegen_flags: <defaults>
</compile_context>

<pallas_src>
import functools
import inspect

import jax
import jax.numpy as jnp
from jax.experimental import pallas as pl
from jax.experimental.pallas import tpu as pltpu


def _round_up(x, m):
    return ((x + m - 1) // m) * m


def _supports_pipeline_mode():
    """True if this Pallas exposes BlockSpec(pipeline_mode=pl.Buffered(k))."""
    if not hasattr(pl, "Buffered"):
        return False
    for target in (pl.BlockSpec, getattr(pl.BlockSpec, "__init__", None)):
        if target is None:
            continue
        try:
            if "pipeline_mode" in inspect.signature(target).parameters:
                return True
        except (TypeError, ValueError):
            continue
    return False


_HAS_BUFFERED = _supports_pipeline_mode()


def _vmem_budget_bytes():
    """~75% of physical VMEM: 96 MiB on v5e/v6e (128 MiB), 48 MiB on v7x (64 MiB)."""
    try:
        cap = int(pltpu.get_tpu_info().vmem_capacity_bytes)
    except Exception:
        cap = 64 * 1024 * 1024          # conservative default (v7x-sized)
    return (cap * 3) // 4


def _choose_row_tiling(M):
    """Pick (tm, M_pad): tm multiple of 8, <=256 rows, low padding waste, and an
    even number of >=2 grid steps when M is big enough (v7x 2-TC balance)."""
    M8 = _round_up(max(M, 1), 8)
    if M8 <= 64:                        # too small to split usefully
        return M8, M8
    n_tiles = pl.cdiv(M8, 256)          # target <=256 rows per tile
    if n_tiles % 2:                     # even #tiles -> balanced across 2 TCs
        n_tiles += 1
    tm = _round_up(pl.cdiv(M8, n_tiles), 8)
    return tm, tm * n_tiles


def _resident_spec(block_shape, single_buffer):
    """BlockSpec for an operand resident in VMEM across all grid steps."""
    if single_buffer and _HAS_BUFFERED:
        return pl.BlockSpec(block_shape, lambda i: (0, 0),
                            pipeline_mode=pl.Buffered(1))
    return pl.BlockSpec(block_shape, lambda i: (0, 0))


# ----------------------------------------------------------------------------
# Fused Pallas kernel:  h = x ; for each layer: h = act(h @ W_l + b_l)
# (no activation on the last layer) ; o = h
# ----------------------------------------------------------------------------
def _fused_mlp_kernel(x_ref, *refs, num_layers, use_bias):
    o_ref = refs[-1]
    layer_refs = refs[:-1]

    h = x_ref[...]
    for l in range(num_layers):
        if use_bias:
            w_ref = layer_refs[2 * l]
            b_ref = layer_refs[2 * l + 1]
        else:
            w_ref = layer_refs[l]
            b_ref = None

        lhs = h if h.dtype == w_ref.dtype else h.astype(w_ref.dtype)
        y = jnp.dot(lhs, w_ref[...], preferred_element_type=jnp.float32)
        if b_ref is not None:
            y = y + b_ref[...]                  # (1, N) broadcast over rows
        if l < num_layers - 1:
            y = jnp.maximum(y, 0.0)             # ReLU on hidden layers only
        h = y

    o_ref[...] = h.astype(o_ref.dtype)


# ----------------------------------------------------------------------------
# One-time (hoisted out of the hot path) padding of weights / biases.
# ----------------------------------------------------------------------------
def prepare_mlp_params(params, in_features, *, use_bias=True,
                       compute_dtype=jnp.float32):
    """params: list of (W:(in,out) == torch weight.T, b:(out,)).
    Pads every feature dim to a multiple of 128 (lane-dense) once, so the
    per-call forward does no weight padding work.  compute_dtype=bf16 is
    recommended for inference on v6e/v7x (f32 accumulation is preserved)."""
    cdt = jnp.dtype(compute_dtype)
    feat = [in_features] + [w.shape[1] for (w, _) in params]
    feat_pad = [_round_up(f, 128) for f in feat]

    layers = []
    for l, (w, b) in enumerate(params):
        kin, kout = w.shape
        assert kin == feat[l], f"layer {l}: expected {feat[l]} inputs, got {kin}"
        w_p = (jnp.zeros((feat_pad[l], feat_pad[l + 1]), cdt)
               .at[:kin, :kout].set(w.astype(cdt)))
        b_p = None
        if use_bias:
            b_p = (jnp.zeros((1, feat_pad[l + 1]), jnp.float32)
                   .at[0, :kout].set(b.astype(jnp.float32)))
        layers.append((w_p, b_p))

    return dict(layers=layers, feat=feat, feat_pad=feat_pad,
                use_bias=use_bias, compute_dtype=cdt)


# ----------------------------------------------------------------------------
# Forward pass
# ----------------------------------------------------------------------------
def mlp_forward(x, prepared, *, out_dtype=None):
    """x: (B, ...) -> flattened (B, K); prepared: output of prepare_mlp_params."""
    if x.ndim > 2:
        x = x.reshape(x.shape[0], -1)           # == torch x.view(x.shape[0], -1)
    out_dtype = jnp.dtype(out_dtype) if out_dtype is not None else jnp.dtype(x.dtype)

    layers = prepared["layers"]
    feat, feat_pad = prepared["feat"], prepared["feat_pad"]
    use_bias = prepared["use_bias"]
    cdt = prepared["compute_dtype"]
    num_layers = len(layers)

    M, K = x.shape
    assert K == feat[0], f"expected {feat[0]} input features, got {K}"
    K_pad = feat_pad[0]
    N_out, N_out_pad = feat[-1], feat_pad[-1]

    tm, M_pad = _choose_row_tiling(M)

    # Skip the per-call pad/copy of x entirely when it is already aligned.
    if M_pad == M and K_pad == K and x.dtype == cdt:
        x_p = x
    else:
        x_p = jnp.zeros((M_pad, K_pad), cdt).at[:M, :K].set(x.astype(cdt))

    operands = [x_p]
    in_specs_sb = [pl.BlockSpec((tm, K_pad), lambda i: (i, 0))]   # single-buffered residents
    in_specs_db = [pl.BlockSpec((tm, K_pad), lambda i: (i, 0))]   # default double-buffered
    for l, (w_p, b_p) in enumerate(layers):
        wshape = (feat_pad[l], feat_pad[l + 1])
        operands.append(w_p)
        in_specs_sb.append(_resident_spec(wshape, single_buffer=True))
        in_specs_db.append(_resident_spec(wshape, single_buffer=False))
        if use_bias:
            bshape = (1, feat_pad[l + 1])
            operands.append(b_p)
            in_specs_sb.append(_resident_spec(bshape, single_buffer=True))
            in_specs_db.append(_resident_spec(bshape, single_buffer=False))

    # ---- honest VMEM accounting -------------------------------------------
    resident_bytes = sum(int(op.size) * op.dtype.itemsize for op in operands[1:])

    def _est(n_resident_bufs):
        return (n_resident_bufs * resident_bytes
                + 2 * tm * K_pad * cdt.itemsize                  # x tile, double-buffered
                + 2 * tm * N_out_pad * out_dtype.itemsize        # out tile, double-buffered
                + 2 * tm * max(feat_pad) * 4)                    # two live f32 h/y slabs

    budget = _vmem_budget_bytes()
    vmem_est = _est(1 if _HAS_BUFFERED else 2)
    assert vmem_est < budget, (
        f"fused MLP needs ~{vmem_est / 2**20:.1f} MiB VMEM, budget is "
        f"{budget / 2**20:.1f} MiB; a tiled per-layer path is required")
    # TODO(synk): K/N-tiled per-layer fallback (reduction grid axis marked
    # "arbitrary", pl.when-gated bias/ReLU on the f32 accumulator) for MLPs
    # whose padded weights exceed the VMEM budget, and an N-tiled out_spec for
    # very wide classifier-style heads.

    kernel = functools.partial(
        _fused_mlp_kernel, num_layers=num_layers, use_bias=use_bias)

    def _build(in_specs):
        return pl.pallas_call(
            kernel,
            out_shape=jax.ShapeDtypeStruct((M_pad, N_out_pad), out_dtype),
            grid_spec=pl.GridSpec(
                grid=(M_pad // tm,),
                in_specs=in_specs,
                out_specs=pl.BlockSpec((tm, N_out_pad), lambda i: (i, 0)),
            ),
            compiler_params=pltpu.CompilerParams(
                dimension_semantics=("parallel",),   # shard row tiles across TCs
                vmem_limit_bytes=int(budget),
            ),
        )

    if _HAS_BUFFERED:
        try:
            out_p = jax.block_until_ready(_build(in_specs_sb)(*operands))
        except Exception:
            # Pallas version without Buffered(1) lowering: fall back to default
            # double-buffered resident weights (costs ~2x weight VMEM).
            out_p = _build(in_specs_db)(*operands)
    else:
        out_p = _build(in_specs_db)(*operands)

    return out_p[:M, :N_out]


# ----------------------------------------------------------------------------
# Parameter init mimicking nn.Linear default (uniform +/- 1/sqrt(fan_in))
# ----------------------------------------------------------------------------
def init_mlp_params(key, list_neurons, bias=True):
    params = []
    for idx, n_in in enumerate(list_neurons[:-1]):
        n_out = list_neurons[idx + 1]
        key, kw, kb = jax.random.split(key, 3)
        bound = 1.0 / jnp.sqrt(jnp.float32(n_in))
        # stored as (in, out) == torch weight.T
        w = jax.random.uniform(kw, (n_in, n_out), jnp.float32, -bound, bound)
        if bias:
            b = jax.random.uniform(kb, (n_out,), jnp.float32, -bound, bound)
        else:
            b = jnp.zeros((n_out,), jnp.float32)
        params.append((w, b))
    return params


# ----------------------------------------------------------------------------
if __name__ == "__main__":
    key = jax.random.PRNGKey(0)
    kx, kp = jax.random.split(key)

    # NCHW image batch: (2, 4, 16, 16) -> flatten to (2, 1024)
    x = jax.random.normal(kx, (2, 4, 16, 16), dtype=jnp.float32)

    # list_neurons = [in_features, hidden, hidden, out]
    list_neurons = [4 * 16 * 16, 32, 32, 8]
    params = init_mlp_params(kp, list_neurons, bias=True)

    # Plain-JAX reference (same math, no Pallas).
    ref = x.reshape(x.shape[0], -1)
    for (w, b) in params[:-1]:
        ref = jnp.maximum(ref @ w + b, 0.0)
    ref = ref @ params[-1][0] + params[-1][1]

    # f32 compute path: exact-tolerance check.
    prep_f32 = prepare_mlp_params(params, list_neurons[0], use_bias=True,
                                  compute_dtype=jnp.float32)
    out = jax.block_until_ready(mlp_forward(x, prep_f32))
    assert out.shape == (2, 8)
    assert jnp.allclose(out, ref, atol=1e-4, rtol=1e-4)

    # bf16 compute path (recommended on v6e/v7x: native-bf16 MXU, halved
    # resident-weight VMEM; accumulation stays f32).
    prep_bf16 = prepare_mlp_params(params, list_neurons[0], use_bias=True,
                                   compute_dtype=jnp.bfloat16)
    out_bf16 = jax.block_until_ready(
        mlp_forward(x, prep_bf16, out_dtype=jnp.float32))
    assert out_bf16.shape == (2, 8)
    assert jnp.allclose(out_bf16, ref, atol=1e-1, rtol=1e-1)

    print("KERNEL_OK")
</pallas_src>

<mosaic_0001>
module attributes {stable_mosaic.version = 11 : i64} {
  func.func @_fused_mlp_kernel(%arg0: i32, %arg1: memref<8x1024xf32, #tpu.memory_space<vmem>>, %arg2: memref<1024x128xf32, #tpu.memory_space<vmem>>, %arg3: memref<1x128xf32, #tpu.memory_space<vmem>>, %arg4: memref<128x128xf32, #tpu.memory_space<vmem>>, %arg5: memref<1x128xf32, #tpu.memory_space<vmem>>, %arg6: memref<128x128xf32, #tpu.memory_space<vmem>>, %arg7: memref<1x128xf32, #tpu.memory_space<vmem>>, %arg8: memref<8x128xf32, #tpu.memory_space<vmem>>) attributes {dimension_semantics = [#tpu.dimension_semantics<parallel>], iteration_bounds = array<i64: 1>, scalar_prefetch = 0 : i64, scratch_operands = 0 : i64, tpu.core_type = #tpu.core_type<tc>, window_params = [{transform_indices = @transform_0, window_bounds = array<i64: 8, 1024>}, {pipeline_mode = #tpu.pipeline_mode<synchronous>, transform_indices = @transform_1, window_bounds = array<i64: 1024, 128>}, {pipeline_mode = #tpu.pipeline_mode<synchronous>, transform_indices = @transform_2, window_bounds = array<i64: 1, 128>}, {pipeline_mode = #tpu.pipeline_mode<synchronous>, transform_indices = @transform_3, window_bounds = array<i64: 128, 128>}, {pipeline_mode = #tpu.pipeline_mode<synchronous>, transform_indices = @transform_4, window_bounds = array<i64: 1, 128>}, {pipeline_mode = #tpu.pipeline_mode<synchronous>, transform_indices = @transform_5, window_bounds = array<i64: 128, 128>}, {pipeline_mode = #tpu.pipeline_mode<synchronous>, transform_indices = @transform_6, window_bounds = array<i64: 1, 128>}, {transform_indices = @transform_7, window_bounds = array<i64: 8, 128>}]} {
    %c0 = arith.constant 0 : index
    %c0_0 = arith.constant 0 : index
    %0 = vector.load %arg1[%c0, %c0_0] : memref<8x1024xf32, #tpu.memory_space<vmem>>, vector<8x1024xf32>
    %c0_1 = arith.constant 0 : index
    %c0_2 = arith.constant 0 : index
    %1 = vector.load %arg2[%c0_1, %c0_2] : memref<1024x128xf32, #tpu.memory_space<vmem>>, vector<1024x128xf32>
    %cst = arith.constant dense<0.000000e+00> : vector<8x128xf32>
    %2 = tpu.matmul %0, %1, %cst {dimension_numbers = #tpu.dot_dimension_numbers<[1], [0], [0], [1], [0, 0, 1, 1], [], []>} : vector<8x1024xf32>, vector<1024x128xf32>, vector<8x128xf32> -> vector<8x128xf32>
    %c0_3 = arith.constant 0 : index
    %c0_4 = arith.constant 0 : index
    %3 = vector.load %arg3[%c0_3, %c0_4] : memref<1x128xf32, #tpu.memory_space<vmem>>, vector<1x128xf32>
    %4 = vector.broadcast %3 : vector<1x128xf32> to vector<8x128xf32>
    %5 = arith.addf %2, %4 : vector<8x128xf32>
    %cst_5 = arith.constant 0.000000e+00 : f32
    %6 = vector.broadcast %cst_5 : f32 to vector<8x128xf32>
    %7 = arith.maximumf %5, %6 : vector<8x128xf32>
    %c0_6 = arith.constant 0 : index
    %c0_7 = arith.constant 0 : index
    %8 = vector.load %arg4[%c0_6, %c0_7] : memref<128x128xf32, #tpu.memory_space<vmem>>, vector<128x128xf32>
    %cst_8 = arith.constant dense<0.000000e+00> : vector<8x128xf32>
    %9 = tpu.matmul %7, %8, %cst_8 {dimension_numbers = #tpu.dot_dimension_numbers<[1], [0], [0], [1], [0, 0, 1, 1], [], []>} : vector<8x128xf32>, vector<128x128xf32>, vector<8x128xf32> -> vector<8x128xf32>
    %c0_9 = arith.constant 0 : index
    %c0_10 = arith.constant 0 : index
    %10 = vector.load %arg5[%c0_9, %c0_10] : memref<1x128xf32, #tpu.memory_space<vmem>>, vector<1x128xf32>
    %11 = vector.broadcast %10 : vector<1x128xf32> to vector<8x128xf32>
    %12 = arith.addf %9, %11 : vector<8x128xf32>
    %cst_11 = arith.constant 0.000000e+00 : f32
    %13 = vector.broadcast %cst_11 : f32 to vector<8x128xf32>
    %14 = arith.maximumf %12, %13 : vector<8x128xf32>
    %c0_12 = arith.constant 0 : index
    %c0_13 = arith.constant 0 : index
    %15 = vector.load %arg6[%c0_12, %c0_13] : memref<128x128xf32, #tpu.memory_space<vmem>>, vector<128x128xf32>
    %cst_14 = arith.constant dense<0.000000e+00> : vector<8x128xf32>
    %16 = tpu.matmul %14, %15, %cst_14 {dimension_numbers = #tpu.dot_dimension_numbers<[1], [0], [0], [1], [0, 0, 1, 1], [], []>} : vector<8x128xf32>, vector<128x128xf32>, vector<8x128xf32> -> vector<8x128xf32>
    %c0_15 = arith.constant 0 : index
    %c0_16 = arith.constant 0 : index
    %17 = vector.load %arg7[%c0_15, %c0_16] : memref<1x128xf32, #tpu.memory_space<vmem>>, vector<1x128xf32>
    %18 = vector.broadcast %17 : vector<1x128xf32> to vector<8x128xf32>
    %19 = arith.addf %16, %18 : vector<8x128xf32>
    %c0_17 = arith.constant 0 : index
    %c0_18 = arith.constant 0 : index
    %20 = vector.load %arg8[%c0_17, %c0_18] : memref<8x128xf32, #tpu.memory_space<vmem>>, vector<8x128xf32>
    tpu.vector_store %arg8[%c0_17, %c0_18], %19 {strides = array<i32>} : memref<8x128xf32, #tpu.memory_space<vmem>>, vector<8x128xf32>,
    return
  }
  func.func @transform_0(%arg0: i32) -> (i32, i32) {
    %c0_i32 = arith.constant 0 : i32
    %c0_i32_0 = arith.constant 0 : i32
    return %arg0, %c0_i32 : i32, i32
  }
  func.func @transform_1(%arg0: i32) -> (i32, i32) {
    %c0_i32 = arith.constant 0 : i32
    %c0_i32_0 = arith.constant 0 : i32
    %c0_i32_1 = arith.constant 0 : i32
    return %c0_i32, %c0_i32_0 : i32, i32
  }
  func.func @transform_2(%arg0: i32) -> (i32, i32) {
    %c0_i32 = arith.constant 0 : i32
    %c0_i32_0 = arith.constant 0 : i32
    %c0_i32_1 = arith.constant 0 : i32
    return %c0_i32, %c0_i32_0 : i32, i32
  }
  func.func @transform_3(%arg0: i32) -> (i32, i32) {
    %c0_i32 = arith.constant 0 : i32
    %c0_i32_0 = arith.constant 0 : i32
    %c0_i32_1 = arith.constant 0 : i32
    return %c0_i32, %c0_i32_0 : i32, i32
  }
  func.func @transform_4(%arg0: i32) -> (i32, i32) {
    %c0_i32 = arith.constant 0 : i32
    %c0_i32_0 = arith.constant 0 : i32
    %c0_i32_1 = arith.constant 0 : i32
    return %c0_i32, %c0_i32_0 : i32, i32
  }
  func.func @transform_5(%arg0: i32) -> (i32, i32) {
    %c0_i32 = arith.constant 0 : i32
    %c0_i32_0 = arith.constant 0 : i32
    %c0_i32_1 = arith.constant 0 : i32
    return %c0_i32, %c0_i32_0 : i32, i32
  }
  func.func @transform_6(%arg0: i32) -> (i32, i32) {
    %c0_i32 = arith.constant 0 : i32
    %c0_i32_0 = arith.constant 0 : i32
    %c0_i32_1 = arith.constant 0 : i32
    return %c0_i32, %c0_i32_0 : i32, i32
  }
  func.func @transform_7(%arg0: i32) -> (i32, i32) {
    %c0_i32 = arith.constant 0 : i32
    %c0_i32_0 = arith.constant 0 : i32
    return %arg0, %c0_i32 : i32, i32
  }
}

module attributes {stable_mosaic.version = 11 : i64} {
  func.func @_fused_mlp_kernel(%arg0: i32, %arg1: memref<8x1024xf32, #tpu.memory_space<vmem>>, %arg2: memref<1024x128xf32, #tpu.memory_space<vmem>>, %arg3: memref<1x128xf32, #tpu.memory_space<vmem>>, %arg4: memref<128x128xf32, #tpu.memory_space<vmem>>, %arg5: memref<1x128xf32, #tpu.memory_space<vmem>>, %arg6: memref<128x128xf32, #tpu.memory_space<vmem>>, %arg7: memref<1x128xf32, #tpu.memory_space<vmem>>, %arg8: memref<8x128xf32, #tpu.memory_space<vmem>>) attributes {dimension_semantics = [#tpu.dimension_semantics<parallel>], iteration_bounds = array<i64: 1>, scalar_prefetch = 0 : i64, scratch_operands = 0 : i64, tpu.core_type = #tpu.core_type<tc>, window_params = [{transform_indices = @transform_0, window_bounds = array<i64: 8, 1024>}, {pipeline_mode = #tpu.pipeline_mode<synchronous>, transform_indices = @transform_1, window_bounds = array<i64: 1024, 128>}, {pipeline_mode = #tpu.pipeline_mode<synchronous>, transform_indices = @transform_2, window_bounds = array<i64: 1, 128>}, {pipeline_mode = #tpu.pipeline_mode<synchronous>, transform_indices = @transform_3, window_bounds = array<i64: 128, 128>}, {pipeline_mode = #tpu.pipeline_mode<synchronous>, transform_indices = @transform_4, window_bounds = array<i64: 1, 128>}, {pipeline_mode = #tpu.pipeline_mode<synchronous>, transform_indices = @transform_5, window_bounds = array<i64: 128, 128>}, {pipeline_mode = #tpu.pipeline_mode<synchronous>, transform_indices = @transform_6, window_bounds = array<i64: 1, 128>}, {transform_indices = @transform_7, window_bounds = array<i64: 8, 128>}]} {
    %c0 = arith.constant 0 : index
    %c0_0 = arith.constant 0 : index
    %0 = vector.load %arg1[%c0, %c0_0] : memref<8x1024xf32, #tpu.memory_space<vmem>>, vector<8x1024xf32>
    %c0_1 = arith.constant 0 : index
    %c0_2 = arith.constant 0 : index
    %1 = vector.load %arg2[%c0_1, %c0_2] : memref<1024x128xf32, #tpu.memory_space<vmem>>, vector<1024x128xf32>
    %cst = arith.constant dense<0.000000e+00> : vector<8x128xf32>
    %2 = tpu.matmul %0, %1, %cst {dimension_numbers = #tpu.dot_dimension_numbers<[1], [0], [0], [1], [0, 0, 1, 1], [], []>} : vector<8x1024xf32>, vector<1024x128xf32>, vector<8x128xf32> -> vector<8x128xf32>
    %c0_3 = arith.constant 0 : index
    %c0_4 = arith.constant 0 : index
    %3 = vector.load %arg3[%c0_3, %c0_4] : memref<1x128xf32, #tpu.memory_space<vmem>>, vector<1x128xf32>
    %4 = vector.broadcast %3 : vector<1x128xf32> to vector<8x128xf32>
    %5 = arith.addf %2, %4 : vector<8x128xf32>
    %cst_5 = arith.constant 0.000000e+00 : f32
    %6 = vector.broadcast %cst_5 : f32 to vector<8x128xf32>
    %7 = arith.maximumf %5, %6 : vector<8x128xf32>
    %c0_6 = arith.constant 0 : index
    %c0_7 = arith.constant 0 : index
    %8 = vector.load %arg4[%c0_6, %c0_7] : memref<128x128xf32, #tpu.memory_space<vmem>>, vector<128x128xf32>
    %cst_8 = arith.constant dense<0.000000e+00> : vector<8x128xf32>
    %9 = tpu.matmul %7, %8, %cst_8 {dimension_numbers = #tpu.dot_dimension_numbers<[1], [0], [0], [1], [0, 0, 1, 1], [], []>} : vector<8x128xf32>, vector<128x128xf32>, vector<8x128xf32> -> vector<8x128xf32>
    %c0_9 = arith.constant 0 : index
    %c0_10 = arith.constant 0 : index
    %10 = vector.load %arg5[%c0_9, %c0_10] : memref<1x128xf32, #tpu.memory_space<vmem>>, vector<1x128xf32>
    %11 = vector.broadcast %10 : vector<1x128xf32> to vector<8x128xf32>
    %12 = arith.addf %9, %11 : vector<8x128xf32>
    %cst_11 = arith.constant 0.000000e+00 : f32
    %13 = vector.broadcast %cst_11 : f32 to vector<8x128xf32>
    %14 = arith.maximumf %12, %13 : vector<8x128xf32>
    %c0_12 = arith.constant 0 : index
    %c0_13 = arith.constant 0 : index
    %15 = vector.load %arg6[%c0_12, %c0_13] : memref<128x128xf32, #tpu.memory_space<vmem>>, vector<128x128xf32>
    %cst_14 = arith.constant dense<0.000000e+00> : vector<8x128xf32>
    %16 = tpu.matmul %14, %15, %cst_14 {dimension_numbers = #tpu.dot_dimension_numbers<[1], [0], [0], [1], [0, 0, 1, 1], [], []>} : vector<8x128xf32>, vector<128x128xf32>, vector<8x128xf32> -> vector<8x128xf32>
    %c0_15 = arith.constant 0 : index
    %c0_16 = arith.constant 0 : index
    %17 = vector.load %arg7[%c0_15, %c0_16] : memref<1x128xf32, #tpu.memory_space<vmem>>, vector<1x128xf32>
    %18 = vector.broadcast %17 : vector<1x128xf32> to vector<8x128xf32>
    %19 = arith.addf %16, %18 : vector<8x128xf32>
    %c0_17 = arith.constant 0 : index
    %c0_18 = arith.constant 0 : index
    %20 = vector.load %arg8[%c0_17, %c0_18] : memref<8x128xf32, #tpu.memory_space<vmem>>, vector<8x128xf32>
    tpu.vector_store %arg8[%c0_17, %c0_18], %19 {strides = array<i32>} : memref<8x128xf32, #tpu.memory_space<vmem>>, vector<8x128xf32>,
    return
  }
  func.func @transform_0(%arg0: i32) -> (i32, i32) {
    %c0_i32 = arith.constant 0 : i32
    %c0_i32_0 = arith.constant 0 : i32
    return %arg0, %c0_i32 : i32, i32
  }
  func.func @transform_1(%arg0: i32) -> (i32, i32) {
    %c0_i32 = arith.constant 0 : i32
    %c0_i32_0 = arith.constant 0 : i32
    %c0_i32_1 = arith.constant 0 : i32
    return %c0_i32, %c0_i32_0 : i32, i32
  }
  func.func @transform_2(%arg0: i32) -> (i32, i32) {
    %c0_i32 = arith.constant 0 : i32
    %c0_i32_0 = arith.constant 0 : i32
    %c0_i32_1 = arith.constant 0 : i32
    return %c0_i32, %c0_i32_0 : i32, i32
  }
  func.func @transform_3(%arg0: i32) -> (i32, i32) {
    %c0_i32 = arith.constant 0 : i32
    %c0_i32_0 = arith.constant 0 : i32
    %c0_i32_1 = arith.constant 0 : i32
    return %c0_i32, %c0_i32_0 : i32, i32
  }
  func.func @transform_4(%arg0: i32) -> (i32, i32) {
    %c0_i32 = arith.constant 0 : i32
    %c0_i32_0 = arith.constant 0 : i32
    %c0_i32_1 = arith.constant 0 : i32
    return %c0_i32, %c0_i32_0 : i32, i32
  }
  func.func @transform_5(%arg0: i32) -> (i32, i32) {
    %c0_i32 = arith.constant 0 : i32
    %c0_i32_0 = arith.constant 0 : i32
    %c0_i32_1 = arith.constant 0 : i32
    return %c0_i32, %c0_i32_0 : i32, i32
  }
  func.func @transform_6(%arg0: i32) -> (i32, i32) {
    %c0_i32 = arith.constant 0 : i32
    %c0_i32_0 = arith.constant 0 : i32
    %c0_i32_1 = arith.constant 0 : i32
    return %c0_i32, %c0_i32_0 : i32, i32
  }
  func.func @transform_7(%arg0: i32) -> (i32, i32) {
    %c0_i32 = arith.constant 0 : i32
    %c0_i32_0 = arith.constant 0 : i32
    return %arg0, %c0_i32 : i32, i32
  }
}

</mosaic_0001>

<llo_original>
// kernel: tpu_custom_call.1
$region0: #{tpu_custom_call.1}
  #allocation0 [shape = 'u32[]', space=smem, size = 0x4, offset = 0x4, fixed_abs, tag = 'smem constant byte address 0x4 - core index']
  #allocation1 [shape = 'u32[72,128]{1,0:T(1,128)}', space=vmem, size = 0x9000, scoped, tag = 'internal scratch']
  %s0 = inlined_call_operand.hbm [shape: f32[8,1024], index: 0, kind: input, shape index: {}]
  %s1 = inlined_call_operand.hbm [shape: f32[1024,128], index: 1, kind: input, shape index: {}]
  %s2 = inlined_call_operand.vmem [shape: f32[1,128], index: 2, kind: input, shape index: {}]
  %s3 = inlined_call_operand.hbm [shape: f32[128,128], index: 3, kind: input, shape index: {}]
  %s4 = inlined_call_operand.vmem [shape: f32[1,128], index: 4, kind: input, shape index: {}]
  %s5 = inlined_call_operand.hbm [shape: f32[128,128], index: 5, kind: input, shape index: {}]
  %s6 = inlined_call_operand.vmem [shape: f32[1,128], index: 6, kind: input, shape index: {}]
  %s7 = inlined_call_operand.hbm [shape: f32[8,128], index: 7, kind: output, shape index: {}]
  %s8 = sld [smem:[#allocation0]]
  $region54: #{tpu_custom_call.1} parent=0
    _
  %s10 = ssub.s32 1, %s8
  %s11 = scalar_select 0, %s10, %s8
  $region1: #{tpu_custom_call.1} parent=0
    #allocation2 [shape = 'u8[32768]{0}', space=vmem, size = 0x8000, scoped, tag = 'input window, operand 0, single buffered']
    #allocation3 [shape = 's32[1]{0}', space=sflag, size = 0x4, scoped, tag = 'scoped memory for tpu_custom_call.1']
    #allocation4 [shape = 's32[1]{0}', space=sflag, size = 0x4, scoped, tag = 'scoped memory for tpu_custom_call.1']
    #allocation5 [shape = 'u8[524288]{0}', space=vmem, size = 0x80000, scoped, tag = 'input window, operand 1, single buffered']
    #allocation6 [shape = 's32[1]{0}', space=sflag, size = 0x4, scoped, tag = 'scoped memory for tpu_custom_call.1']
    #allocation7 [shape = 'u8[65536]{0}', space=vmem, size = 0x10000, scoped, tag = 'input window, operand 3, single buffered']
    #allocation8 [shape = 'u8[65536]{0}', space=vmem, size = 0x10000, scoped, tag = 'input window, operand 5, single buffered']
    #allocation9 [shape = 's32[1]{0}', space=sflag, size = 0x4, scoped, tag = 'scoped memory for tpu_custom_call.1']
    #allocation10 [shape = 'u8[4096]{0}', space=vmem, size = 0x1000, scoped, tag = 'output window, operand 0, single buffered']
    %12 = vsyncpa [#allocation3], 0
    %13 = vsyncpa [#allocation6], 0
    %14 = vsyncpa [#allocation9], 0
    %15 = vsyncpa [#allocation4], 0
    // Predicated region
    $region2: #{tpu_custom_call.1} parent=1 // pred_check
      _
    $region3: #{tpu_custom_call.1} parent=1 // pred_check_branch
      %17 = sbr.rel (0) target = $region5
    $region4: #{tpu_custom_call.1} parent=1 // pred_region
      %19 = vsyncadd [#allocation3], 0
      %s21 = sshll.u32 %s0, 4
      %s22 = int_to_ptr.hbm [resolvable:$true] %s21
      %s23 = sshll.u32 [#allocation2], 4
      %s24 = int_to_ptr.vmem [resolvable:$true] %s23
      %26 = dma.hbm_to_vmem [thread:$0]  %s22, 1024, %s24, [#allocation3]
    $region5: #{tpu_custom_call.1} parent=1 // pred_fallthru
      _
    // Predicated region
    $region6: #{tpu_custom_call.1} parent=1 // pred_check
      _
    $region7: #{tpu_custom_call.1} parent=1 // pred_check_branch
      %28 = sbr.rel (0) target = $region9
    $region8: #{tpu_custom_call.1} parent=1 // pred_region
      %30 = vsyncadd [#allocation6], 0
      %s31 = sshll.u32 %s1, 4
      %s32 = int_to_ptr.hbm [resolvable:$true] %s31
      %s33 = sshll.u32 [#allocation5], 4
      %s34 = int_to_ptr.vmem [resolvable:$true] %s33
      %39 = dma.hbm_to_vmem [thread:$0]  %s32, 16384, %s34, [#allocation6], 128, 128, 8
    $region9: #{tpu_custom_call.1} parent=1 // pred_fallthru
      _
    // Predicated region
    $region10: #{tpu_custom_call.1} parent=1 // pred_check
      _
    $region11: #{tpu_custom_call.1} parent=1 // pred_check_branch
      %41 = sbr.rel (0) target = $region13
    $region12: #{tpu_custom_call.1} parent=1 // pred_region
      _
    $region13: #{tpu_custom_call.1} parent=1 // pred_fallthru
      _
    // Predicated region
    $region14: #{tpu_custom_call.1} parent=1 // pred_check
      _
    $region15: #{tpu_custom_call.1} parent=1 // pred_check_branch
      %43 = sbr.rel (0) target = $region17
    $region16: #{tpu_custom_call.1} parent=1 // pred_region
      %45 = vsyncadd [#allocation6], 0
      %s46 = sshll.u32 %s3, 4
      %s47 = int_to_ptr.hbm [resolvable:$true] %s46
      %s48 = sshll.u32 [#allocation7], 4
      %s49 = int_to_ptr.vmem [resolvable:$true] %s48
      %54 = dma.hbm_to_vmem [thread:$0]  %s47, 2048, %s49, [#allocation6], 128, 128, 8
    $region17: #{tpu_custom_call.1} parent=1 // pred_fallthru
      _
    // Predicated region
    $region18: #{tpu_custom_call.1} parent=1 // pred_check
      _
    $region19: #{tpu_custom_call.1} parent=1 // pred_check_branch
      %56 = sbr.rel (0) target = $region21
    $region20: #{tpu_custom_call.1} parent=1 // pred_region
      _
    $region21: #{tpu_custom_call.1} parent=1 // pred_fallthru
      _
    // Predicated region
    $region22: #{tpu_custom_call.1} parent=1 // pred_check
      _
    $region23: #{tpu_custom_call.1} parent=1 // pred_check_branch
      %58 = sbr.rel (0) target = $region25
    $region24: #{tpu_custom_call.1} parent=1 // pred_region
      %60 = vsyncadd [#allocation9], 0
      %s61 = sshll.u32 %s5, 4
      %s62 = int_to_ptr.hbm [resolvable:$true] %s61
      %s63 = sshll.u32 [#allocation8], 4
      %s64 = int_to_ptr.vmem [resolvable:$true] %s63
      %69 = dma.hbm_to_vmem [thread:$0]  %s62, 2048, %s64, [#allocation9], 128, 128, 8
    $region25: #{tpu_custom_call.1} parent=1 // pred_fallthru
      _
    // Predicated region
    $region26: #{tpu_custom_call.1} parent=1 // pred_check
      _
    $region27: #{tpu_custom_call.1} parent=1 // pred_check_branch
      %71 = sbr.rel (0) target = $region29
    $region28: #{tpu_custom_call.1} parent=1 // pred_region
      _
    $region29: #{tpu_custom_call.1} parent=1 // pred_fallthru
      _
    // Predicated region
    $region30: #{tpu_custom_call.1} parent=1 // pred_check
      _
    $region31: #{tpu_custom_call.1} parent=1 // pred_check_branch
      %73 = sbr.rel (0) target = $region33
    $region32: #{tpu_custom_call.1} parent=1 // pred_region
      %75 = dma.done [#allocation3], 1024
    $region33: #{tpu_custom_call.1} parent=1 // pred_fallthru
      _
    // Predicated region
    $region34: #{tpu_custom_call.1} parent=1 // pred_check
      _
    $region35: #{tpu_custom_call.1} parent=1 // pred_check_branch
      %77 = sbr.rel (0) target = $region37
    $region36: #{tpu_custom_call.1} parent=1 // pred_region
      %79 = dma.done [#allocation6], 16384
    $region37: #{tpu_custom_call.1} parent=1 // pred_fallthru
      _
    // Predicated region
    $region38: #{tpu_custom_call.1} parent=1 // pred_check
      _
    $region39: #{tpu_custom_call.1} parent=1 // pred_check_branch
      %81 = sbr.rel (0) target = $region41
    $region40: #{tpu_custom_call.1} parent=1 // pred_region
      %83 = dma.done [#allocation6], 2048
    $region41: #{tpu_custom_call.1} parent=1 // pred_fallthru
      _
    // Predicated region
    $region42: #{tpu_custom_call.1} parent=1 // pred_check
      _
    $region43: #{tpu_custom_call.1} parent=1 // pred_check_branch
      %85 = sbr.rel (0) target = $region45
    $region44: #{tpu_custom_call.1} parent=1 // pred_region
      %87 = dma.done [#allocation9], 2048
    $region45: #{tpu_custom_call.1} parent=1 // pred_fallthru
      _
    %v88 = vld [vmem:[#allocation2] sm:$0xff]
    %v89 = vld [vmem:[#allocation2 + $0x8] sm:$0xff]
    %v90 = vld [vmem:[#allocation2 + $0x10] sm:$0xff]
    %v91 = vld [vmem:[#allocation2 + $0x18] sm:$0xff]
    %v92 = vld [vmem:[#allocation2 + $0x20] sm:$0xff]
    %v93 = vld [vmem:[#allocation2 + $0x28] sm:$0xff]
    %v94 = vld [vmem:[#allocation2 + $0x30] sm:$0xff]
    %v95 = vld [vmem:[#allocation2 + $0x38] sm:$0xff]
    %v96 = vld [vmem:[#allocation5] sm:$0xff]
    %v97 = vld [vmem:[#allocation5 + $0x8] sm:$0xff]
    %v98 = vld [vmem:[#allocation5 + $0x10] sm:$0xff]
    %v99 = vld [vmem:[#allocation5 + $0x18] sm:$0xff]
    %v100 = vld [vmem:[#allocation5 + $0x20] sm:$0xff]
    %v101 = vld [vmem:[#allocation5 + $0x28] sm:$0xff]
    %v102 = vld [vmem:[#allocation5 + $0x30] sm:$0xff]
    %v103 = vld [vmem:[#allocation5 + $0x38] sm:$0xff]
    %v104 = vld [vmem:[#allocation5 + $0x40] sm:$0xff]
    %v105 = vld [vmem:[#allocation5 + $0x48] sm:$0xff]
    %v106 = vld [vmem:[#allocation5 + $0x50] sm:$0xff]
    %v107 = vld [vmem:[#allocation5 + $0x58] sm:$0xff]
    %v108 = vld [vmem:[#allocation5 + $0x60] sm:$0xff]
    %v109 = vld [vmem:[#allocation5 + $0x68] sm:$0xff]
    %v110 = vld [vmem:[#allocation5 + $0x70] sm:$0xff]
    %v111 = vld [vmem:[#allocation5 + $0x78] sm:$0xff]
    %v112 = vld [vmem:[#allocation5 + $0x80] sm:$0xff]
    %v113 = vld [vmem:[#allocation5 + $0x88] sm:$0xff]
    %v114 = vld [vmem:[#allocation5 + $0x90] sm:$0xff]
    %v115 = vld [vmem:[#allocation5 + $0x98] sm:$0xff]
    %v116 = vld [vmem:[#allocation5 + $0xa0] sm:$0xff]
    %v117 = vld [vmem:[#allocation5 + $0xa8] sm:$0xff]
    %v118 = vld [vmem:[#allocation5 + $0xb0] sm:$0xff]
    %v119 = vld [vmem:[#allocation5 + $0xb8] sm:$0xff]
    %v120 = vld [vmem:[#allocation5 + $0xc0] sm:$0xff]
    %v121 = vld [vmem:[#allocation5 + $0xc8] sm:$0xff]
    %v122 = vld [vmem:[#allocation5 + $0xd0] sm:$0xff]
    %v123 = vld [vmem:[#allocation5 + $0xd8] sm:$0xff]
    %v124 = vld [vmem:[#allocation5 + $0xe0] sm:$0xff]
    %v125 = vld [vmem:[#allocation5 + $0xe8] sm:$0xff]
    %v126 = vld [vmem:[#allocation5 + $0xf0] sm:$0xff]
    %v127 = vld [vmem:[#allocation5 + $0xf8] sm:$0xff]
    %v128 = vld [vmem:[#allocation5 + $0x100] sm:$0xff]
    %v129 = vld [vmem:[#allocation5 + $0x108] sm:$0xff]
    %v130 = vld [vmem:[#allocation5 + $0x110] sm:$0xff]
    %v131 = vld [vmem:[#allocation5 + $0x118] sm:$0xff]
    %v132 = vld [vmem:[#allocation5 + $0x120] sm:$0xff]
    %v133 = vld [vmem:[#allocation5 + $0x128] sm:$0xff]
    %v134 = vld [vmem:[#allocation5 + $0x130] sm:$0xff]
    %v135 = vld [vmem:[#allocation5 + $0x138] sm:$0xff]
    %v136 = vld [vmem:[#allocation5 + $0x140] sm:$0xff]
    %v137 = vld [vmem:[#allocation5 + $0x148] sm:$0xff]
    %v138 = vld [vmem:[#allocation5 + $0x150] sm:$0xff]
    %v139 = vld [vmem:[#allocation5 + $0x158] sm:$0xff]
    %v140 = vld [vmem:[#allocation5 + $0x160] sm:$0xff]
    %v141 = vld [vmem:[#allocation5 + $0x168] sm:$0xff]
    %v142 = vld [vmem:[#allocation5 + $0x170] sm:$0xff]
    %v143 = vld [vmem:[#allocation5 + $0x178] sm:$0xff]
    %v144 = vld [vmem:[#allocation5 + $0x180] sm:$0xff]
    %v145 = vld [vmem:[#allocation5 + $0x188] sm:$0xff]
    %v146 = vld [vmem:[#allocation5 + $0x190] sm:$0xff]
    %v147 = vld [vmem:[#allocation5 + $0x198] sm:$0xff]
    %v148 = vld [vmem:[#allocation5 + $0x1a0] sm:$0xff]
    %v149 = vld [vmem:[#allocation5 + $0x1a8] sm:$0xff]
    %v150 = vld [vmem:[#allocation5 + $0x1b0] sm:$0xff]
    %v151 = vld [vmem:[#allocation5 + $0x1b8] sm:$0xff]
    %v152 = vld [vmem:[#allocation5 + $0x1c0] sm:$0xff]
    %v153 = vld [vmem:[#allocation5 + $0x1c8] sm:$0xff]
    %v154 = vld [vmem:[#allocation5 + $0x1d0] sm:$0xff]
    %v155 = vld [vmem:[#allocation5 + $0x1d8] sm:$0xff]
    %v156 = vld [vmem:[#allocation5 + $0x1e0] sm:$0xff]
    %v157 = vld [vmem:[#allocation5 + $0x1e8] sm:$0xff]
    %v158 = vld [vmem:[#allocation5 + $0x1f0] sm:$0xff]
    %v159 = vld [vmem:[#allocation5 + $0x1f8] sm:$0xff]
    %v160 = vld [vmem:[#allocation5 + $0x200] sm:$0xff]
    %v161 = vld [vmem:[#allocation5 + $0x208] sm:$0xff]
    %v162 = vld [vmem:[#allocation5 + $0x210] sm:$0xff]
    %v163 = vld [vmem:[#allocation5 + $0x218] sm:$0xff]
    %v164 = vld [vmem:[#allocation5 + $0x220] sm:$0xff]
    %v165 = vld [vmem:[#allocation5 + $0x228] sm:$0xff]
    %v166 = vld [vmem:[#allocation5 + $0x230] sm:$0xff]
    %v167 = vld [vmem:[#allocation5 + $0x238] sm:$0xff]
    %v168 = vld [vmem:[#allocation5 + $0x240] sm:$0xff]
    %v169 = vld [vmem:[#allocation5 + $0x248] sm:$0xff]
    %v170 = vld [vmem:[#allocation5 + $0x250] sm:$0xff]
    %v171 = vld [vmem:[#allocation5 + $0x258] sm:$0xff]
    %v172 = vld [vmem:[#allocation5 + $0x260] sm:$0xff]
    %v173 = vld [vmem:[#allocation5 + $0x268] sm:$0xff]
    %v174 = vld [vmem:[#allocation5 + $0x270] sm:$0xff]
    %v175 = vld [vmem:[#allocation5 + $0x278] sm:$0xff]
    %v176 = vld [vmem:[#allocation5 + $0x280] sm:$0xff]
    %v177 = vld [vmem:[#allocation5 + $0x288] sm:$0xff]
    %v178 = vld [vmem:[#allocation5 + $0x290] sm:$0xff]
    %v179 = vld [vmem:[#allocation5 + $0x298] sm:$0xff]
    %v180 = vld [vmem:[#allocation5 + $0x2a0] sm:$0xff]
    %v181 = vld [vmem:[#allocation5 + $0x2a8] sm:$0xff]
    %v182 = vld [vmem:[#allocation5 + $0x2b0] sm:$0xff]
    %v183 = vld [vmem:[#allocation5 + $0x2b8] sm:$0xff]
    %v184 = vld [vmem:[#allocation5 + $0x2c0] sm:$0xff]
    %v185 = vld [vmem:[#allocation5 + $0x2c8] sm:$0xff]
    %v186 = vld [vmem:[#allocation5 + $0x2d0] sm:$0xff]
    %v187 = vld [vmem:[#allocation5 + $0x2d8] sm:$0xff]
    %v188 = vld [vmem:[#allocation5 + $0x2e0] sm:$0xff]
    %v189 = vld [vmem:[#allocation5 + $0x2e8] sm:$0xff]
    %v190 = vld [vmem:[#allocation5 + $0x2f0] sm:$0xff]
    %v191 = vld [vmem:[#allocation5 + $0x2f8] sm:$0xff]
    %v192 = vld [vmem:[#allocation5 + $0x300] sm:$0xff]
    %v193 = vld [vmem:[#allocation5 + $0x308] sm:$0xff]
    %v194 = vld [vmem:[#allocation5 + $0x310] sm:$0xff]
    %v195 = vld [vmem:[#allocation5 + $0x318] sm:$0xff]
    %v196 = vld [vmem:[#allocation5 + $0x320] sm:$0xff]
    %v197 = vld [vmem:[#allocation5 + $0x328] sm:$0xff]
    %v198 = vld [vmem:[#allocation5 + $0x330] sm:$0xff]
    %v199 = vld [vmem:[#allocation5 + $0x338] sm:$0xff]
    %v200 = vld [vmem:[#allocation5 + $0x340] sm:$0xff]
    %v201 = vld [vmem:[#allocation5 + $0x348] sm:$0xff]
    %v202 = vld [vmem:[#allocation5 + $0x350] sm:$0xff]
    %v203 = vld [vmem:[#allocation5 + $0x358] sm:$0xff]
    %v204 = vld [vmem:[#allocation5 + $0x360] sm:$0xff]
    %v205 = vld [vmem:[#allocation5 + $0x368] sm:$0xff]
    %v206 = vld [vmem:[#allocation5 + $0x370] sm:$0xff]
    %v207 = vld [vmem:[#allocation5 + $0x378] sm:$0xff]
    %v208 = vld [vmem:[#allocation5 + $0x380] sm:$0xff]
    %v209 = vld [vmem:[#allocation5 + $0x388] sm:$0xff]
    %v210 = vld [vmem:[#allocation5 + $0x390] sm:$0xff]
    %v211 = vld [vmem:[#allocation5 + $0x398] sm:$0xff]
    %v212 = vld [vmem:[#allocation5 + $0x3a0] sm:$0xff]
    %v213 = vld [vmem:[#allocation5 + $0x3a8] sm:$0xff]
    %v214 = vld [vmem:[#allocation5 + $0x3b0] sm:$0xff]
    %v215 = vld [vmem:[#allocation5 + $0x3b8] sm:$0xff]
    %v216 = vld [vmem:[#allocation5 + $0x3c0] sm:$0xff]
    %v217 = vld [vmem:[#allocation5 + $0x3c8] sm:$0xff]
    %v218 = vld [vmem:[#allocation5 + $0x3d0] sm:$0xff]
    %v219 = vld [vmem:[#allocation5 + $0x3d8] sm:$0xff]
    %v220 = vld [vmem:[#allocation5 + $0x3e0] sm:$0xff]
    %v221 = vld [vmem:[#allocation5 + $0x3e8] sm:$0xff]
    %v222 = vld [vmem:[#allocation5 + $0x3f0] sm:$0xff]
    %v223 = vld [vmem:[#allocation5 + $0x3f8] sm:$0xff]
    %v224 = vld [vmem:[%s2] sm:$0x1]
    %v226 = vperm.slane %v224, 0
    %228 = vmatpush.msra.mxu0 %v111
    %229 = vmatpush.msra.mxu0 %v110
    %230 = vmatpush.msra.mxu0 %v109
    %231 = vmatpush.msra.mxu0 %v108
    %232 = vmatpush.msra.mxu0 %v107
    %233 = vmatpush.msra.mxu0 %v106
    %234 = vmatpush.msra.mxu0 %v105
    %235 = vmatpush.msra.mxu0 %v104
    %236 = vmatpush.msra.mxu0 %v103
    %237 = vmatpush.msra.mxu0 %v102
    %238 = vmatpush.msra.mxu0 %v101
    %239 = vmatpush.msra.mxu0 %v100
    %240 = vmatpush.msra.mxu0 %v99
    %241 = vmatpush.msra.mxu0 %v98
    %242 = vmatpush.msra.mxu0 %v97
    %243 = vmatpush.msra.mxu0 %v96
    %244 = vmatmul.f32.gmra.mxu0 %v88
    %v245 = vpop.f32.mrf.mxu0
    %v246 = vadd.f32 %v226, %v245
    %247 = vdwg.mxu0
    %248 = vmatpush.msra.mxu0 %v127
    %249 = vmatpush.msra.mxu0 %v126
    %250 = vmatpush.msra.mxu0 %v125
    %251 = vmatpush.msra.mxu0 %v124
    %252 = vmatpush.msra.mxu0 %v123
    %253 = vmatpush.msra.mxu0 %v122
    %254 = vmatpush.msra.mxu0 %v121
    %255 = vmatpush.msra.mxu0 %v120
    %256 = vmatpush.msra.mxu0 %v119
    %257 = vmatpush.msra.mxu0 %v118
    %258 = vmatpush.msra.mxu0 %v117
    %259 = vmatpush.msra.mxu0 %v116
    %260 = vmatpush.msra.mxu0 %v115
    %261 = vmatpush.msra.mxu0 %v114
    %262 = vmatpush.msra.mxu0 %v113
    %263 = vmatpush.msra.mxu0 %v112
    %264 = vmatmul.f32.gmra.mxu0 %v89
    %v265 = vpop.f32.mrf.mxu0
    %v266 = vadd.f32 %v246, %v265
    %267 = vdwg.mxu0
    %268 = vmatpush.msra.mxu0 %v143
    %269 = vmatpush.msra.mxu0 %v142
    %270 = vmatpush.msra.mxu0 %v141
    %271 = vmatpush.msra.mxu0 %v140
    %272 = vmatpush.msra.mxu0 %v139
    %273 = vmatpush.msra.mxu0 %v138
    %274 = vmatpush.msra.mxu0 %v137
    %275 = vmatpush.msra.mxu0 %v136
    %276 = vmatpush.msra.mxu0 %v135
    %277 = vmatpush.msra.mxu0 %v134
    %278 = vmatpush.msra.mxu0 %v133
    %279 = vmatpush.msra.mxu0 %v132
    %280 = vmatpush.msra.mxu0 %v131
    %281 = vmatpush.msra.mxu0 %v130
    %282 = vmatpush.msra.mxu0 %v129
    %283 = vmatpush.msra.mxu0 %v128
    %284 = vmatmul.f32.gmra.mxu0 %v90
    %v285 = vpop.f32.mrf.mxu0
    %v286 = vadd.f32 %v266, %v285
    %287 = vdwg.mxu0
    %288 = vmatpush.msra.mxu0 %v159
    %289 = vmatpush.msra.mxu0 %v158
    %290 = vmatpush.msra.mxu0 %v157
    %291 = vmatpush.msra.mxu0 %v156
    %292 = vmatpush.msra.mxu0 %v155
    %293 = vmatpush.msra.mxu0 %v154
    %294 = vmatpush.msra.mxu0 %v153
    %295 = vmatpush.msra.mxu0 %v152
    %296 = vmatpush.msra.mxu0 %v151
    %297 = vmatpush.msra.mxu0 %v150
    %298 = vmatpush.msra.mxu0 %v149
    %299 = vmatpush.msra.mxu0 %v148
    %300 = vmatpush.msra.mxu0 %v147
    %301 = vmatpush.msra.mxu0 %v146
    %302 = vmatpush.msra.mxu0 %v145
    %303 = vmatpush.msra.mxu0 %v144
    %304 = vmatmul.f32.gmra.mxu0 %v91
    %v305 = vpop.f32.mrf.mxu0
    %v306 = vadd.f32 %v286, %v305
    %307 = vdwg.mxu0
    %308 = vmatpush.msra.mxu0 %v175
    %309 = vmatpush.msra.mxu0 %v174
    %310 = vmatpush.msra.mxu0 %v173
    %311 = vmatpush.msra.mxu0 %v172
    %312 = vmatpush.msra.mxu0 %v171
    %313 = vmatpush.msra.mxu0 %v170
    %314 = vmatpush.msra.mxu0 %v169
    %315 = vmatpush.msra.mxu0 %v168
    %316 = vmatpush.msra.mxu0 %v167
    %317 = vmatpush.msra.mxu0 %v166
    %318 = vmatpush.msra.mxu0 %v165
    %319 = vmatpush.msra.mxu0 %v164
    %320 = vmatpush.msra.mxu0 %v163
    %321 = vmatpush.msra.mxu0 %v162
    %322 = vmatpush.msra.mxu0 %v161
    %323 = vmatpush.msra.mxu0 %v160
    %324 = vmatmul.f32.gmra.mxu0 %v92
    %v325 = vpop.f32.mrf.mxu0
    %v326 = vadd.f32 %v306, %v325
    %327 = vdwg.mxu0
    %328 = vmatpush.msra.mxu0 %v191
    %329 = vmatpush.msra.mxu0 %v190
    %330 = vmatpush.msra.mxu0 %v189
    %331 = vmatpush.msra.mxu0 %v188
    %332 = vmatpush.msra.mxu0 %v187
    %333 = vmatpush.msra.mxu0 %v186
    %334 = vmatpush.msra.mxu0 %v185
    %335 = vmatpush.msra.mxu0 %v184
    %336 = vmatpush.msra.mxu0 %v183
    %337 = vmatpush.msra.mxu0 %v182
    %338 = vmatpush.msra.mxu0 %v181
    %339 = vmatpush.msra.mxu0 %v180
    %340 = vmatpush.msra.mxu0 %v179
    %341 = vmatpush.msra.mxu0 %v178
    %342 = vmatpush.msra.mxu0 %v177
    %343 = vmatpush.msra.mxu0 %v176
    %344 = vmatmul.f32.gmra.mxu0 %v93
    %v345 = vpop.f32.mrf.mxu0
    %v346 = vadd.f32 %v326, %v345
    %347 = vdwg.mxu0
    %348 = vmatpush.msra.mxu0 %v207
    %349 = vmatpush.msra.mxu0 %v206
    %350 = vmatpush.msra.mxu0 %v205
    %351 = vmatpush.msra.mxu0 %v204
    %352 = vmatpush.msra.mxu0 %v203
    %353 = vmatpush.msra.mxu0 %v202
    %354 = vmatpush.msra.mxu0 %v201
    %355 = vmatpush.msra.mxu0 %v200
    %356 = vmatpush.msra.mxu0 %v199
    %357 = vmatpush.msra.mxu0 %v198
    %358 = vmatpush.msra.mxu0 %v197
    %359 = vmatpush.msra.mxu0 %v196
    %360 = vmatpush.msra.mxu0 %v195
    %361 = vmatpush.msra.mxu0 %v194
    %362 = vmatpush.msra.mxu0 %v193
    %363 = vmatpush.msra.mxu0 %v192
    %364 = vmatmul.f32.gmra.mxu0 %v94
    %v365 = vpop.f32.mrf.mxu0
    %v366 = vadd.f32 %v346, %v365
    %367 = vdwg.mxu0
    %368 = vmatpush.msra.mxu0 %v223
    %369 = vmatpush.msra.mxu0 %v222
    %370 = vmatpush.msra.mxu0 %v221
    %371 = vmatpush.msra.mxu0 %v220
    %372 = vmatpush.msra.mxu0 %v219
    %373 = vmatpush.msra.mxu0 %v218
    %374 = vmatpush.msra.mxu0 %v217
    %375 = vmatpush.msra.mxu0 %v216
    %376 = vmatpush.msra.mxu0 %v215
    %377 = vmatpush.msra.mxu0 %v214
    %378 = vmatpush.msra.mxu0 %v213
    %379 = vmatpush.msra.mxu0 %v212
    %380 = vmatpush.msra.mxu0 %v211
    %381 = vmatpush.msra.mxu0 %v210
    %382 = vmatpush.msra.mxu0 %v209
    %383 = vmatpush.msra.mxu0 %v208
    %384 = vmatmul.f32.gmra.mxu0 %v95
    %v385 = vpop.f32.mrf.mxu0
    %v386 = vadd.f32 %v366, %v385
    %387 = vdwg.mxu0
    %v388 = vmax.f32 %v386, 0.0
    %v389 = vld [vmem:[#allocation7] sm:$0xff]
    %v390 = vld [vmem:[#allocation7 + $0x8] sm:$0xff]
    %v391 = vld [vmem:[#allocation7 + $0x10] sm:$0xff]
    %v392 = vld [vmem:[#allocation7 + $0x18] sm:$0xff]
    %v393 = vld [vmem:[#allocation7 + $0x20] sm:$0xff]
    %v394 = vld [vmem:[#allocation7 + $0x28] sm:$0xff]
    %v395 = vld [vmem:[#allocation7 + $0x30] sm:$0xff]
    %v396 = vld [vmem:[#allocation7 + $0x38] sm:$0xff]
    %v397 = vld [vmem:[#allocation7 + $0x40] sm:$0xff]
    %v398 = vld [vmem:[#allocation7 + $0x48] sm:$0xff]
    %v399 = vld [vmem:[#allocation7 + $0x50] sm:$0xff]
    %v400 = vld [vmem:[#allocation7 + $0x58] sm:$0xff]
    %v401 = vld [vmem:[#allocation7 + $0x60] sm:$0xff]
    %v402 = vld [vmem:[#allocation7 + $0x68] sm:$0xff]
    %v403 = vld [vmem:[#allocation7 + $0x70] sm:$0xff]
    %v404 = vld [vmem:[#allocation7 + $0x78] sm:$0xff]
    %v405 = vld [vmem:[%s4] sm:$0x1]
    %v407 = vperm.slane %v405, 0
    %409 = vmatpush.msra.mxu0 %v404
    %410 = vmatpush.msra.mxu0 %v403
    %411 = vmatpush.msra.mxu0 %v402
    %412 = vmatpush.msra.mxu0 %v401
    %413 = vmatpush.msra.mxu0 %v400
    %414 = vmatpush.msra.mxu0 %v399
    %415 = vmatpush.msra.mxu0 %v398
    %416 = vmatpush.msra.mxu0 %v397
    %417 = vmatpush.msra.mxu0 %v396
    %418 = vmatpush.msra.mxu0 %v395
    %419 = vmatpush.msra.mxu0 %v394
    %420 = vmatpush.msra.mxu0 %v393
    %421 = vmatpush.msra.mxu0 %v392
    %422 = vmatpush.msra.mxu0 %v391
    %423 = vmatpush.msra.mxu0 %v390
    %424 = vmatpush.msra.mxu0 %v389
    %425 = vmatmul.f32.gmra.mxu0 %v388
    %v426 = vpop.f32.mrf.mxu0
    %v427 = vadd.f32 %v407, %v426
    %428 = vdwg.mxu0
    %v429 = vmax.f32 %v427, 0.0
    %v430 = vld [vmem:[#allocation8] sm:$0xff]
    %v431 = vld [vmem:[#allocation8 + $0x8] sm:$0xff]
    %v432 = vld [vmem:[#allocation8 + $0x10] sm:$0xff]
    %v433 = vld [vmem:[#allocation8 + $0x18] sm:$0xff]
    %v434 = vld [vmem:[#allocation8 + $0x20] sm:$0xff]
    %v435 = vld [vmem:[#allocation8 + $0x28] sm:$0xff]
    %v436 = vld [vmem:[#allocation8 + $0x30] sm:$0xff]
    %v437 = vld [vmem:[#allocation8 + $0x38] sm:$0xff]
    %v438 = vld [vmem:[#allocation8 + $0x40] sm:$0xff]
    %v439 = vld [vmem:[#allocation8 + $0x48] sm:$0xff]
    %v440 = vld [vmem:[#allocation8 + $0x50] sm:$0xff]
    %v441 = vld [vmem:[#allocation8 + $0x58] sm:$0xff]
    %v442 = vld [vmem:[#allocation8 + $0x60] sm:$0xff]
    %v443 = vld [vmem:[#allocation8 + $0x68] sm:$0xff]
    %v444 = vld [vmem:[#allocation8 + $0x70] sm:$0xff]
    %v445 = vld [vmem:[#allocation8 + $0x78] sm:$0xff]
    %v446 = vld [vmem:[%s6] sm:$0x1]
    %v448 = vperm.slane %v446, 0
    %450 = vmatpush.msra.mxu0 %v445
    %451 = vmatpush.msra.mxu0 %v444
    %452 = vmatpush.msra.mxu0 %v443
    %453 = vmatpush.msra.mxu0 %v442
    %454 = vmatpush.msra.mxu0 %v441
    %455 = vmatpush.msra.mxu0 %v440
    %456 = vmatpush.msra.mxu0 %v439
    %457 = vmatpush.msra.mxu0 %v438
    %458 = vmatpush.msra.mxu0 %v437
    %459 = vmatpush.msra.mxu0 %v436
    %460 = vmatpush.msra.mxu0 %v435
    %461 = vmatpush.msra.mxu0 %v434
    %462 = vmatpush.msra.mxu0 %v433
    %463 = vmatpush.msra.mxu0 %v432
    %464 = vmatpush.msra.mxu0 %v431
    %465 = vmatpush.msra.mxu0 %v430
    %466 = vmatmul.f32.gmra.mxu0 %v429
    %v467 = vpop.f32.mrf.mxu0
    %v468 = vadd.f32 %v448, %v467
    %469 = vdwg.mxu0
    %470 = vst [vmem:[#allocation10] sm:$0xff] %v468
    // Predicated region
    $region46: #{tpu_custom_call.1} parent=1 // pred_check
      _
    $region47: #{tpu_custom_call.1} parent=1 // pred_check_branch
      %472 = sbr.rel (0) target = $region49
    $region48: #{tpu_custom_call.1} parent=1 // pred_region
      %474 = vsyncadd [#allocation4], 0
      %s476 = sshll.u32 [#allocation10], 4
      %s477 = int_to_ptr.vmem [resolvable:$true] %s476
      %s478 = sshll.u32 %s7, 4
      %s479 = int_to_ptr.hbm [resolvable:$true] %s478
      %481 = dma.vmem_to_hbm [thread:$0]  %s477, 128, %s479, [#allocation4]
    $region49: #{tpu_custom_call.1} parent=1 // pred_fallthru
      _
    // Predicated region
    $region50: #{tpu_custom_call.1} parent=1 // pred_check
      _
    $region51: #{tpu_custom_call.1} parent=1 // pred_check_branch
      %483 = sbr.rel (0) target = $region53
    $region52: #{tpu_custom_call.1} parent=1 // pred_region
      %485 = dma.done [#allocation4], 128
    $region53: #{tpu_custom_call.1} parent=1 // pred_fallthru
      _
    %486 = vsyncpa [#allocation3], 1
    %487 = vsyncpa [#allocation6], 1
    %488 = vsyncpa [#allocation9], 1
    %489 = vsyncpa [#allocation4], 1

// kernel: tpu_custom_call.1
$region0: #{tpu_custom_call.1}
  #allocation0 [shape = 'u32[]', space=smem, size = 0x4, offset = 0x4, fixed_abs, tag = 'smem constant byte address 0x4 - core index']
  #allocation1 [shape = 'u32[72,128]{1,0:T(1,128)}', space=vmem, size = 0x9000, scoped, tag = 'internal scratch']
  %s0 = inlined_call_operand.hbm [shape: f32[8,1024], index: 0, kind: input, shape index: {}]
  %s1 = inlined_call_operand.hbm [shape: f32[1024,128], index: 1, kind: input, shape index: {}]
  %s2 = inlined_call_operand.vmem [shape: f32[1,128], index: 2, kind: input, shape index: {}]
  %s3 = inlined_call_operand.hbm [shape: f32[128,128], index: 3, kind: input, shape index: {}]
  %s4 = inlined_call_operand.vmem [shape: f32[1,128], index: 4, kind: input, shape index: {}]
  %s5 = inlined_call_operand.hbm [shape: f32[128,128], index: 5, kind: input, shape index: {}]
  %s6 = inlined_call_operand.vmem [shape: f32[1,128], index: 6, kind: input, shape index: {}]
  %s7 = inlined_call_operand.hbm [shape: f32[8,128], index: 7, kind: output, shape index: {}]
  %s8 = sld [smem:[#allocation0]]
  $region54: #{tpu_custom_call.1} parent=0
    _
  %s10 = ssub.s32 1, %s8
  %s11 = scalar_select 0, %s10, %s8
  $region1: #{tpu_custom_call.1} parent=0
    #allocation2 [shape = 'u8[32768]{0}', space=vmem, size = 0x8000, scoped, tag = 'input window, operand 0, single buffered']
    #allocation3 [shape = 's32[1]{0}', space=sflag, size = 0x4, scoped, tag = 'scoped memory for tpu_custom_call.1']
    #allocation4 [shape = 's32[1]{0}', space=sflag, size = 0x4, scoped, tag = 'scoped memory for tpu_custom_call.1']
    #allocation5 [shape = 'u8[524288]{0}', space=vmem, size = 0x80000, scoped, tag = 'input window, operand 1, single buffered']
    #allocation6 [shape = 's32[1]{0}', space=sflag, size = 0x4, scoped, tag = 'scoped memory for tpu_custom_call.1']
    #allocation7 [shape = 'u8[65536]{0}', space=vmem, size = 0x10000, scoped, tag = 'input window, operand 3, single buffered']
    #allocation8 [shape = 'u8[65536]{0}', space=vmem, size = 0x10000, scoped, tag = 'input window, operand 5, single buffered']
    #allocation9 [shape = 's32[1]{0}', space=sflag, size = 0x4, scoped, tag = 'scoped memory for tpu_custom_call.1']
    #allocation10 [shape = 'u8[4096]{0}', space=vmem, size = 0x1000, scoped, tag = 'output window, operand 0, single buffered']
    %12 = vsyncpa [#allocation3], 0
    %13 = vsyncpa [#allocation6], 0
    %14 = vsyncpa [#allocation9], 0
    %15 = vsyncpa [#allocation4], 0
    // Predicated region
    $region2: #{tpu_custom_call.1} parent=1 // pred_check
      _
    $region3: #{tpu_custom_call.1} parent=1 // pred_check_branch
      %17 = sbr.rel (0) target = $region5
    $region4: #{tpu_custom_call.1} parent=1 // pred_region
      %19 = vsyncadd [#allocation3], 0
      %s21 = sshll.u32 %s0, 4
      %s22 = int_to_ptr.hbm [resolvable:$true] %s21
      %s23 = sshll.u32 [#allocation2], 4
      %s24 = int_to_ptr.vmem [resolvable:$true] %s23
      %26 = dma.hbm_to_vmem [thread:$0]  %s22, 1024, %s24, [#allocation3]
    $region5: #{tpu_custom_call.1} parent=1 // pred_fallthru
      _
    // Predicated region
    $region6: #{tpu_custom_call.1} parent=1 // pred_check
      _
    $region7: #{tpu_custom_call.1} parent=1 // pred_check_branch
      %28 = sbr.rel (0) target = $region9
    $region8: #{tpu_custom_call.1} parent=1 // pred_region
      %30 = vsyncadd [#allocation6], 0
      %s31 = sshll.u32 %s1, 4
      %s32 = int_to_ptr.hbm [resolvable:$true] %s31
      %s33 = sshll.u32 [#allocation5], 4
      %s34 = int_to_ptr.vmem [resolvable:$true] %s33
      %39 = dma.hbm_to_vmem [thread:$0]  %s32, 16384, %s34, [#allocation6], 128, 128, 8
    $region9: #{tpu_custom_call.1} parent=1 // pred_fallthru
      _
    // Predicated region
    $region10: #{tpu_custom_call.1} parent=1 // pred_check
      _
    $region11: #{tpu_custom_call.1} parent=1 // pred_check_branch
      %41 = sbr.rel (0) target = $region13
    $region12: #{tpu_custom_call.1} parent=1 // pred_region
      _
    $region13: #{tpu_custom_call.1} parent=1 // pred_fallthru
      _
    // Predicated region
    $region14: #{tpu_custom_call.1} parent=1 // pred_check
      _
    $region15: #{tpu_custom_call.1} parent=1 // pred_check_branch
      %43 = sbr.rel (0) target = $region17
    $region16: #{tpu_custom_call.1} parent=1 // pred_region
      %45 = vsyncadd [#allocation6], 0
      %s46 = sshll.u32 %s3, 4
      %s47 = int_to_ptr.hbm [resolvable:$true] %s46
      %s48 = sshll.u32 [#allocation7], 4
      %s49 = int_to_ptr.vmem [resolvable:$true] %s48
      %54 = dma.hbm_to_vmem [thread:$0]  %s47, 2048, %s49, [#allocation6], 128, 128, 8
    $region17: #{tpu_custom_call.1} parent=1 // pred_fallthru
      _
    // Predicated region
    $region18: #{tpu_custom_call.1} parent=1 // pred_check
      _
    $region19: #{tpu_custom_call.1} parent=1 // pred_check_branch
      %56 = sbr.rel (0) target = $region21
    $region20: #{tpu_custom_call.1} parent=1 // pred_region
      _
    $region21: #{tpu_custom_call.1} parent=1 // pred_fallthru
      _
    // Predicated region
    $region22: #{tpu_custom_call.1} parent=1 // pred_check
      _
    $region23: #{tpu_custom_call.1} parent=1 // pred_check_branch
      %58 = sbr.rel (0) target = $region25
    $region24: #{tpu_custom_call.1} parent=1 // pred_region
      %60 = vsyncadd [#allocation9], 0
      %s61 = sshll.u32 %s5, 4
      %s62 = int_to_ptr.hbm [resolvable:$true] %s61
      %s63 = sshll.u32 [#allocation8], 4
      %s64 = int_to_ptr.vmem [resolvable:$true] %s63
      %69 = dma.hbm_to_vmem [thread:$0]  %s62, 2048, %s64, [#allocation9], 128, 128, 8
    $region25: #{tpu_custom_call.1} parent=1 // pred_fallthru
      _
    // Predicated region
    $region26: #{tpu_custom_call.1} parent=1 // pred_check
      _
    $region27: #{tpu_custom_call.1} parent=1 // pred_check_branch
      %71 = sbr.rel (0) target = $region29
    $region28: #{tpu_custom_call.1} parent=1 // pred_region
      _
    $region29: #{tpu_custom_call.1} parent=1 // pred_fallthru
      _
    // Predicated region
    $region30: #{tpu_custom_call.1} parent=1 // pred_check
      _
    $region31: #{tpu_custom_call.1} parent=1 // pred_check_branch
      %73 = sbr.rel (0) target = $region33
    $region32: #{tpu_custom_call.1} parent=1 // pred_region
      %75 = dma.done [#allocation3], 1024
    $region33: #{tpu_custom_call.1} parent=1 // pred_fallthru
      _
    // Predicated region
    $region34: #{tpu_custom_call.1} parent=1 // pred_check
      _
    $region35: #{tpu_custom_call.1} parent=1 // pred_check_branch
      %77 = sbr.rel (0) target = $region37
    $region36: #{tpu_custom_call.1} parent=1 // pred_region
      %79 = dma.done [#allocation6], 16384
    $region37: #{tpu_custom_call.1} parent=1 // pred_fallthru
      _
    // Predicated region
    $region38: #{tpu_custom_call.1} parent=1 // pred_check
      _
    $region39: #{tpu_custom_call.1} parent=1 // pred_check_branch
      %81 = sbr.rel (0) target = $region41
    $region40: #{tpu_custom_call.1} parent=1 // pred_region
      %83 = dma.done [#allocation6], 2048
    $region41: #{tpu_custom_call.1} parent=1 // pred_fallthru
      _
    // Predicated region
    $region42: #{tpu_custom_call.1} parent=1 // pred_check
      _
    $region43: #{tpu_custom_call.1} parent=1 // pred_check_branch
      %85 = sbr.rel (0) target = $region45
    $region44: #{tpu_custom_call.1} parent=1 // pred_region
      %87 = dma.done [#allocation9], 2048
    $region45: #{tpu_custom_call.1} parent=1 // pred_fallthru
      _
    %v88 = vld [vmem:[#allocation2] sm:$0xff]
    %v89 = vld [vmem:[#allocation2 + $0x8] sm:$0xff]
    %v90 = vld [vmem:[#allocation2 + $0x10] sm:$0xff]
    %v91 = vld [vmem:[#allocation2 + $0x18] sm:$0xff]
    %v92 = vld [vmem:[#allocation2 + $0x20] sm:$0xff]
    %v93 = vld [vmem:[#allocation2 + $0x28] sm:$0xff]
    %v94 = vld [vmem:[#allocation2 + $0x30] sm:$0xff]
    %v95 = vld [vmem:[#allocation2 + $0x38] sm:$0xff]
    %v96 = vld [vmem:[#allocation5] sm:$0xff]
    %v97 = vld [vmem:[#allocation5 + $0x8] sm:$0xff]
    %v98 = vld [vmem:[#allocation5 + $0x10] sm:$0xff]
    %v99 = vld [vmem:[#allocation5 + $0x18] sm:$0xff]
    %v100 = vld [vmem:[#allocation5 + $0x20] sm:$0xff]
    %v101 = vld [vmem:[#allocation5 + $0x28] sm:$0xff]
    %v102 = vld [vmem:[#allocation5 + $0x30] sm:$0xff]
    %v103 = vld [vmem:[#allocation5 + $0x38] sm:$0xff]
    %v104 = vld [vmem:[#allocation5 + $0x40] sm:$0xff]
    %v105 = vld [vmem:[#allocation5 + $0x48] sm:$0xff]
    %v106 = vld [vmem:[#allocation5 + $0x50] sm:$0xff]
    %v107 = vld [vmem:[#allocation5 + $0x58] sm:$0xff]
    %v108 = vld [vmem:[#allocation5 + $0x60] sm:$0xff]
    %v109 = vld [vmem:[#allocation5 + $0x68] sm:$0xff]
    %v110 = vld [vmem:[#allocation5 + $0x70] sm:$0xff]
    %v111 = vld [vmem:[#allocation5 + $0x78] sm:$0xff]
    %v112 = vld [vmem:[#allocation5 + $0x80] sm:$0xff]
    %v113 = vld [vmem:[#allocation5 + $0x88] sm:$0xff]
    %v114 = vld [vmem:[#allocation5 + $0x90] sm:$0xff]
    %v115 = vld [vmem:[#allocation5 + $0x98] sm:$0xff]
    %v116 = vld [vmem:[#allocation5 + $0xa0] sm:$0xff]
    %v117 = vld [vmem:[#allocation5 + $0xa8] sm:$0xff]
    %v118 = vld [vmem:[#allocation5 + $0xb0] sm:$0xff]
    %v119 = vld [vmem:[#allocation5 + $0xb8] sm:$0xff]
    %v120 = vld [vmem:[#allocation5 + $0xc0] sm:$0xff]
    %v121 = vld [vmem:[#allocation5 + $0xc8] sm:$0xff]
    %v122 = vld [vmem:[#allocation5 + $0xd0] sm:$0xff]
    %v123 = vld [vmem:[#allocation5 + $0xd8] sm:$0xff]
    %v124 = vld [vmem:[#allocation5 + $0xe0] sm:$0xff]
    %v125 = vld [vmem:[#allocation5 + $0xe8] sm:$0xff]
    %v126 = vld [vmem:[#allocation5 + $0xf0] sm:$0xff]
    %v127 = vld [vmem:[#allocation5 + $0xf8] sm:$0xff]
    %v128 = vld [vmem:[#allocation5 + $0x100] sm:$0xff]
    %v129 = vld [vmem:[#allocation5 + $0x108] sm:$0xff]
    %v130 = vld [vmem:[#allocation5 + $0x110] sm:$0xff]
    %v131 = vld [vmem:[#allocation5 + $0x118] sm:$0xff]
    %v132 = vld [vmem:[#allocation5 + $0x120] sm:$0xff]
    %v133 = vld [vmem:[#allocation5 + $0x128] sm:$0xff]
    %v134 = vld [vmem:[#allocation5 + $0x130] sm:$0xff]
    %v135 = vld [vmem:[#allocation5 + $0x138] sm:$0xff]
    %v136 = vld [vmem:[#allocation5 + $0x140] sm:$0xff]
    %v137 = vld [vmem:[#allocation5 + $0x148] sm:$0xff]
    %v138 = vld [vmem:[#allocation5 + $0x150] sm:$0xff]
    %v139 = vld [vmem:[#allocation5 + $0x158] sm:$0xff]
    %v140 = vld [vmem:[#allocation5 + $0x160] sm:$0xff]
    %v141 = vld [vmem:[#allocation5 + $0x168] sm:$0xff]
    %v142 = vld [vmem:[#allocation5 + $0x170] sm:$0xff]
    %v143 = vld [vmem:[#allocation5 + $0x178] sm:$0xff]
    %v144 = vld [vmem:[#allocation5 + $0x180] sm:$0xff]
    %v145 = vld [vmem:[#allocation5 + $0x188] sm:$0xff]
    %v146 = vld [vmem:[#allocation5 + $0x190] sm:$0xff]
    %v147 = vld [vmem:[#allocation5 + $0x198] sm:$0xff]
    %v148 = vld [vmem:[#allocation5 + $0x1a0] sm:$0xff]
    %v149 = vld [vmem:[#allocation5 + $0x1a8] sm:$0xff]
    %v150 = vld [vmem:[#allocation5 + $0x1b0] sm:$0xff]
    %v151 = vld [vmem:[#allocation5 + $0x1b8] sm:$0xff]
    %v152 = vld [vmem:[#allocation5 + $0x1c0] sm:$0xff]
    %v153 = vld [vmem:[#allocation5 + $0x1c8] sm:$0xff]
    %v154 = vld [vmem:[#allocation5 + $0x1d0] sm:$0xff]
    %v155 = vld [vmem:[#allocation5 + $0x1d8] sm:$0xff]
    %v156 = vld [vmem:[#allocation5 + $0x1e0] sm:$0xff]
    %v157 = vld [vmem:[#allocation5 + $0x1e8] sm:$0xff]
    %v158 = vld [vmem:[#allocation5 + $0x1f0] sm:$0xff]
    %v159 = vld [vmem:[#allocation5 + $0x1f8] sm:$0xff]
    %v160 = vld [vmem:[#allocation5 + $0x200] sm:$0xff]
    %v161 = vld [vmem:[#allocation5 + $0x208] sm:$0xff]
    %v162 = vld [vmem:[#allocation5 + $0x210] sm:$0xff]
    %v163 = vld [vmem:[#allocation5 + $0x218] sm:$0xff]
    %v164 = vld [vmem:[#allocation5 + $0x220] sm:$0xff]
    %v165 = vld [vmem:[#allocation5 + $0x228] sm:$0xff]
    %v166 = vld [vmem:[#allocation5 + $0x230] sm:$0xff]
    %v167 = vld [vmem:[#allocation5 + $0x238] sm:$0xff]
    %v168 = vld [vmem:[#allocation5 + $0x240] sm:$0xff]
    %v169 = vld [vmem:[#allocation5 + $0x248] sm:$0xff]
    %v170 = vld [vmem:[#allocation5 + $0x250] sm:$0xff]
    %v171 = vld [vmem:[#allocation5 + $0x258] sm:$0xff]
    %v172 = vld [vmem:[#allocation5 + $0x260] sm:$0xff]
    %v173 = vld [vmem:[#allocation5 + $0x268] sm:$0xff]
    %v174 = vld [vmem:[#allocation5 + $0x270] sm:$0xff]
    %v175 = vld [vmem:[#allocation5 + $0x278] sm:$0xff]
    %v176 = vld [vmem:[#allocation5 + $0x280] sm:$0xff]
    %v177 = vld [vmem:[#allocation5 + $0x288] sm:$0xff]
    %v178 = vld [vmem:[#allocation5 + $0x290] sm:$0xff]
    %v179 = vld [vmem:[#allocation5 + $0x298] sm:$0xff]
    %v180 = vld [vmem:[#allocation5 + $0x2a0] sm:$0xff]
    %v181 = vld [vmem:[#allocation5 + $0x2a8] sm:$0xff]
    %v182 = vld [vmem:[#allocation5 + $0x2b0] sm:$0xff]
    %v183 = vld [vmem:[#allocation5 + $0x2b8] sm:$0xff]
    %v184 = vld [vmem:[#allocation5 + $0x2c0] sm:$0xff]
    %v185 = vld [vmem:[#allocation5 + $0x2c8] sm:$0xff]
    %v186 = vld [vmem:[#allocation5 + $0x2d0] sm:$0xff]
    %v187 = vld [vmem:[#allocation5 + $0x2d8] sm:$0xff]
    %v188 = vld [vmem:[#allocation5 + $0x2e0] sm:$0xff]
    %v189 = vld [vmem:[#allocation5 + $0x2e8] sm:$0xff]
    %v190 = vld [vmem:[#allocation5 + $0x2f0] sm:$0xff]
    %v191 = vld [vmem:[#allocation5 + $0x2f8] sm:$0xff]
    %v192 = vld [vmem:[#allocation5 + $0x300] sm:$0xff]
    %v193 = vld [vmem:[#allocation5 + $0x308] sm:$0xff]
    %v194 = vld [vmem:[#allocation5 + $0x310] sm:$0xff]
    %v195 = vld [vmem:[#allocation5 + $0x318] sm:$0xff]
    %v196 = vld [vmem:[#allocation5 + $0x320] sm:$0xff]
    %v197 = vld [vmem:[#allocation5 + $0x328] sm:$0xff]
    %v198 = vld [vmem:[#allocation5 + $0x330] sm:$0xff]
    %v199 = vld [vmem:[#allocation5 + $0x338] sm:$0xff]
    %v200 = vld [vmem:[#allocation5 + $0x340] sm:$0xff]
    %v201 = vld [vmem:[#allocation5 + $0x348] sm:$0xff]
    %v202 = vld [vmem:[#allocation5 + $0x350] sm:$0xff]
    %v203 = vld [vmem:[#allocation5 + $0x358] sm:$0xff]
    %v204 = vld [vmem:[#allocation5 + $0x360] sm:$0xff]
    %v205 = vld [vmem:[#allocation5 + $0x368] sm:$0xff]
    %v206 = vld [vmem:[#allocation5 + $0x370] sm:$0xff]
    %v207 = vld [vmem:[#allocation5 + $0x378] sm:$0xff]
    %v208 = vld [vmem:[#allocation5 + $0x380] sm:$0xff]
    %v209 = vld [vmem:[#allocation5 + $0x388] sm:$0xff]
    %v210 = vld [vmem:[#allocation5 + $0x390] sm:$0xff]
    %v211 = vld [vmem:[#allocation5 + $0x398] sm:$0xff]
    %v212 = vld [vmem:[#allocation5 + $0x3a0] sm:$0xff]
    %v213 = vld [vmem:[#allocation5 + $0x3a8] sm:$0xff]
    %v214 = vld [vmem:[#allocation5 + $0x3b0] sm:$0xff]
    %v215 = vld [vmem:[#allocation5 + $0x3b8] sm:$0xff]
    %v216 = vld [vmem:[#allocation5 + $0x3c0] sm:$0xff]
    %v217 = vld [vmem:[#allocation5 + $0x3c8] sm:$0xff]
    %v218 = vld [vmem:[#allocation5 + $0x3d0] sm:$0xff]
    %v219 = vld [vmem:[#allocation5 + $0x3d8] sm:$0xff]
    %v220 = vld [vmem:[#allocation5 + $0x3e0] sm:$0xff]
    %v221 = vld [vmem:[#allocation5 + $0x3e8] sm:$0xff]
    %v222 = vld [vmem:[#allocation5 + $0x3f0] sm:$0xff]
    %v223 = vld [vmem:[#allocation5 + $0x3f8] sm:$0xff]
    %v224 = vld [vmem:[%s2] sm:$0x1]
    %v226 = vperm.slane %v224, 0
    %228 = vmatpush.msra.mxu0 %v111
    %229 = vmatpush.msra.mxu0 %v110
    %230 = vmatpush.msra.mxu0 %v109
    %231 = vmatpush.msra.mxu0 %v108
    %232 = vmatpush.msra.mxu0 %v107
    %233 = vmatpush.msra.mxu0 %v106
    %234 = vmatpush.msra.mxu0 %v105
    %235 = vmatpush.msra.mxu0 %v104
    %236 = vmatpush.msra.mxu0 %v103
    %237 = vmatpush.msra.mxu0 %v102
    %238 = vmatpush.msra.mxu0 %v101
    %239 = vmatpush.msra.mxu0 %v100
    %240 = vmatpush.msra.mxu0 %v99
    %241 = vmatpush.msra.mxu0 %v98
    %242 = vmatpush.msra.mxu0 %v97
    %243 = vmatpush.msra.mxu0 %v96
    %244 = vmatmul.f32.gmra.mxu0 %v88
    %v245 = vpop.f32.mrf.mxu0
    %v246 = vadd.f32 %v226, %v245
    %247 = vdwg.mxu0
    %248 = vmatpush.msra.mxu0 %v127
    %249 = vmatpush.msra.mxu0 %v126
    %250 = vmatpush.msra.mxu0 %v125
    %251 = vmatpush.msra.mxu0 %v124
    %252 = vmatpush.msra.mxu0 %v123
    %253 = vmatpush.msra.mxu0 %v122
    %254 = vmatpush.msra.mxu0 %v121
    %255 = vmatpush.msra.mxu0 %v120
    %256 = vmatpush.msra.mxu0 %v119
    %257 = vmatpush.msra.mxu0 %v118
    %258 = vmatpush.msra.mxu0 %v117
    %259 = vmatpush.msra.mxu0 %v116
    %260 = vmatpush.msra.mxu0 %v115
    %261 = vmatpush.msra.mxu0 %v114
    %262 = vmatpush.msra.mxu0 %v113
    %263 = vmatpush.msra.mxu0 %v112
    %264 = vmatmul.f32.gmra.mxu0 %v89
    %v265 = vpop.f32.mrf.mxu0
    %v266 = vadd.f32 %v246, %v265
    %267 = vdwg.mxu0
    %268 = vmatpush.msra.mxu0 %v143
    %269 = vmatpush.msra.mxu0 %v142
    %270 = vmatpush.msra.mxu0 %v141
    %271 = vmatpush.msra.mxu0 %v140
    %272 = vmatpush.msra.mxu0 %v139
    %273 = vmatpush.msra.mxu0 %v138
    %274 = vmatpush.msra.mxu0 %v137
    %275 = vmatpush.msra.mxu0 %v136
    %276 = vmatpush.msra.mxu0 %v135
    %277 = vmatpush.msra.mxu0 %v134
    %278 = vmatpush.msra.mxu0 %v133
    %279 = vmatpush.msra.mxu0 %v132
    %280 = vmatpush.msra.mxu0 %v131
    %281 = vmatpush.msra.mxu0 %v130
    %282 = vmatpush.msra.mxu0 %v129
    %283 = vmatpush.msra.mxu0 %v128
    %284 = vmatmul.f32.gmra.mxu0 %v90
    %v285 = vpop.f32.mrf.mxu0
    %v286 = vadd.f32 %v266, %v285
    %287 = vdwg.mxu0
    %288 = vmatpush.msra.mxu0 %v159
    %289 = vmatpush.msra.mxu0 %v158
    %290 = vmatpush.msra.mxu0 %v157
    %291 = vmatpush.msra.mxu0 %v156
    %292 = vmatpush.msra.mxu0 %v155
    %293 = vmatpush.msra.mxu0 %v154
    %294 = vmatpush.msra.mxu0 %v153
    %295 = vmatpush.msra.mxu0 %v152
    %296 = vmatpush.msra.mxu0 %v151
    %297 = vmatpush.msra.mxu0 %v150
    %298 = vmatpush.msra.mxu0 %v149
    %299 = vmatpush.msra.mxu0 %v148
    %300 = vmatpush.msra.mxu0 %v147
    %301 = vmatpush.msra.mxu0 %v146
    %302 = vmatpush.msra.mxu0 %v145
    %303 = vmatpush.msra.mxu0 %v144
    %304 = vmatmul.f32.gmra.mxu0 %v91
    %v305 = vpop.f32.mrf.mxu0
    %v306 = vadd.f32 %v286, %v305
    %307 = vdwg.mxu0
    %308 = vmatpush.msra.mxu0 %v175
    %309 = vmatpush.msra.mxu0 %v174
    %310 = vmatpush.msra.mxu0 %v173
    %311 = vmatpush.msra.mxu0 %v172
    %312 = vmatpush.msra.mxu0 %v171
    %313 = vmatpush.msra.mxu0 %v170
    %314 = vmatpush.msra.mxu0 %v169
    %315 = vmatpush.msra.mxu0 %v168
    %316 = vmatpush.msra.mxu0 %v167
    %317 = vmatpush.msra.mxu0 %v166
    %318 = vmatpush.msra.mxu0 %v165
    %319 = vmatpush.msra.mxu0 %v164
    %320 = vmatpush.msra.mxu0 %v163
    %321 = vmatpush.msra.mxu0 %v162
    %322 = vmatpush.msra.mxu0 %v161
    %323 = vmatpush.msra.mxu0 %v160
    %324 = vmatmul.f32.gmra.mxu0 %v92
    %v325 = vpop.f32.mrf.mxu0
    %v326 = vadd.f32 %v306, %v325
    %327 = vdwg.mxu0
    %328 = vmatpush.msra.mxu0 %v191
    %329 = vmatpush.msra.mxu0 %v190
    %330 = vmatpush.msra.mxu0 %v189
    %331 = vmatpush.msra.mxu0 %v188
    %332 = vmatpush.msra.mxu0 %v187
    %333 = vmatpush.msra.mxu0 %v186
    %334 = vmatpush.msra.mxu0 %v185
    %335 = vmatpush.msra.mxu0 %v184
    %336 = vmatpush.msra.mxu0 %v183
    %337 = vmatpush.msra.mxu0 %v182
    %338 = vmatpush.msra.mxu0 %v181
    %339 = vmatpush.msra.mxu0 %v180
    %340 = vmatpush.msra.mxu0 %v179
    %341 = vmatpush.msra.mxu0 %v178
    %342 = vmatpush.msra.mxu0 %v177
    %343 = vmatpush.msra.mxu0 %v176
    %344 = vmatmul.f32.gmra.mxu0 %v93
    %v345 = vpop.f32.mrf.mxu0
    %v346 = vadd.f32 %v326, %v345
    %347 = vdwg.mxu0
    %348 = vmatpush.msra.mxu0 %v207
    %349 = vmatpush.msra.mxu0 %v206
    %350 = vmatpush.msra.mxu0 %v205
    %351 = vmatpush.msra.mxu0 %v204
    %352 = vmatpush.msra.mxu0 %v203
    %353 = vmatpush.msra.mxu0 %v202
    %354 = vmatpush.msra.mxu0 %v201
    %355 = vmatpush.msra.mxu0 %v200
    %356 = vmatpush.msra.mxu0 %v199
    %357 = vmatpush.msra.mxu0 %v198
    %358 = vmatpush.msra.mxu0 %v197
    %359 = vmatpush.msra.mxu0 %v196
    %360 = vmatpush.msra.mxu0 %v195
    %361 = vmatpush.msra.mxu0 %v194
    %362 = vmatpush.msra.mxu0 %v193
    %363 = vmatpush.msra.mxu0 %v192
    %364 = vmatmul.f32.gmra.mxu0 %v94
    %v365 = vpop.f32.mrf.mxu0
    %v366 = vadd.f32 %v346, %v365
    %367 = vdwg.mxu0
    %368 = vmatpush.msra.mxu0 %v223
    %369 = vmatpush.msra.mxu0 %v222
    %370 = vmatpush.msra.mxu0 %v221
    %371 = vmatpush.msra.mxu0 %v220
    %372 = vmatpush.msra.mxu0 %v219
    %373 = vmatpush.msra.mxu0 %v218
    %374 = vmatpush.msra.mxu0 %v217
    %375 = vmatpush.msra.mxu0 %v216
    %376 = vmatpush.msra.mxu0 %v215
    %377 = vmatpush.msra.mxu0 %v214
    %378 = vmatpush.msra.mxu0 %v213
    %379 = vmatpush.msra.mxu0 %v212
    %380 = vmatpush.msra.mxu0 %v211
    %381 = vmatpush.msra.mxu0 %v210
    %382 = vmatpush.msra.mxu0 %v209
    %383 = vmatpush.msra.mxu0 %v208
    %384 = vmatmul.f32.gmra.mxu0 %v95
    %v385 = vpop.f32.mrf.mxu0
    %v386 = vadd.f32 %v366, %v385
    %387 = vdwg.mxu0
    %v388 = vmax.f32 %v386, 0.0
    %v389 = vld [vmem:[#allocation7] sm:$0xff]
    %v390 = vld [vmem:[#allocation7 + $0x8] sm:$0xff]
    %v391 = vld [vmem:[#allocation7 + $0x10] sm:$0xff]
    %v392 = vld [vmem:[#allocation7 + $0x18] sm:$0xff]
    %v393 = vld [vmem:[#allocation7 + $0x20] sm:$0xff]
    %v394 = vld [vmem:[#allocation7 + $0x28] sm:$0xff]
    %v395 = vld [vmem:[#allocation7 + $0x30] sm:$0xff]
    %v396 = vld [vmem:[#allocation7 + $0x38] sm:$0xff]
    %v397 = vld [vmem:[#allocation7 + $0x40] sm:$0xff]
    %v398 = vld [vmem:[#allocation7 + $0x48] sm:$0xff]
    %v399 = vld [vmem:[#allocation7 + $0x50] sm:$0xff]
    %v400 = vld [vmem:[#allocation7 + $0x58] sm:$0xff]
    %v401 = vld [vmem:[#allocation7 + $0x60] sm:$0xff]
    %v402 = vld [vmem:[#allocation7 + $0x68] sm:$0xff]
    %v403 = vld [vmem:[#allocation7 + $0x70] sm:$0xff]
    %v404 = vld [vmem:[#allocation7 + $0x78] sm:$0xff]
    %v405 = vld [vmem:[%s4] sm:$0x1]
    %v407 = vperm.slane %v405, 0
    %409 = vmatpush.msra.mxu0 %v404
    %410 = vmatpush.msra.mxu0 %v403
    %411 = vmatpush.msra.mxu0 %v402
    %412 = vmatpush.msra.mxu0 %v401
    %413 = vmatpush.msra.mxu0 %v400
    %414 = vmatpush.msra.mxu0 %v399
    %415 = vmatpush.msra.mxu0 %v398
    %416 = vmatpush.msra.mxu0 %v397
    %417 = vmatpush.msra.mxu0 %v396
    %418 = vmatpush.msra.mxu0 %v395
    %419 = vmatpush.msra.mxu0 %v394
    %420 = vmatpush.msra.mxu0 %v393
    %421 = vmatpush.msra.mxu0 %v392
    %422 = vmatpush.msra.mxu0 %v391
    %423 = vmatpush.msra.mxu0 %v390
    %424 = vmatpush.msra.mxu0 %v389
    %425 = vmatmul.f32.gmra.mxu0 %v388
    %v426 = vpop.f32.mrf.mxu0
    %v427 = vadd.f32 %v407, %v426
    %428 = vdwg.mxu0
    %v429 = vmax.f32 %v427, 0.0
    %v430 = vld [vmem:[#allocation8] sm:$0xff]
    %v431 = vld [vmem:[#allocation8 + $0x8] sm:$0xff]
    %v432 = vld [vmem:[#allocation8 + $0x10] sm:$0xff]
    %v433 = vld [vmem:[#allocation8 + $0x18] sm:$0xff]
    %v434 = vld [vmem:[#allocation8 + $0x20] sm:$0xff]
    %v435 = vld [vmem:[#allocation8 + $0x28] sm:$0xff]
    %v436 = vld [vmem:[#allocation8 + $0x30] sm:$0xff]
    %v437 = vld [vmem:[#allocation8 + $0x38] sm:$0xff]
    %v438 = vld [vmem:[#allocation8 + $0x40] sm:$0xff]
    %v439 = vld [vmem:[#allocation8 + $0x48] sm:$0xff]
    %v440 = vld [vmem:[#allocation8 + $0x50] sm:$0xff]
    %v441 = vld [vmem:[#allocation8 + $0x58] sm:$0xff]
    %v442 = vld [vmem:[#allocation8 + $0x60] sm:$0xff]
    %v443 = vld [vmem:[#allocation8 + $0x68] sm:$0xff]
    %v444 = vld [vmem:[#allocation8 + $0x70] sm:$0xff]
    %v445 = vld [vmem:[#allocation8 + $0x78] sm:$0xff]
    %v446 = vld [vmem:[%s6] sm:$0x1]
    %v448 = vperm.slane %v446, 0
    %450 = vmatpush.msra.mxu0 %v445
    %451 = vmatpush.msra.mxu0 %v444
    %452 = vmatpush.msra.mxu0 %v443
    %453 = vmatpush.msra.mxu0 %v442
    %454 = vmatpush.msra.mxu0 %v441
    %455 = vmatpush.msra.mxu0 %v440
    %456 = vmatpush.msra.mxu0 %v439
    %457 = vmatpush.msra.mxu0 %v438
    %458 = vmatpush.msra.mxu0 %v437
    %459 = vmatpush.msra.mxu0 %v436
    %460 = vmatpush.msra.mxu0 %v435
    %461 = vmatpush.msra.mxu0 %v434
    %462 = vmatpush.msra.mxu0 %v433
    %463 = vmatpush.msra.mxu0 %v432
    %464 = vmatpush.msra.mxu0 %v431
    %465 = vmatpush.msra.mxu0 %v430
    %466 = vmatmul.f32.gmra.mxu0 %v429
    %v467 = vpop.f32.mrf.mxu0
    %v468 = vadd.f32 %v448, %v467
    %469 = vdwg.mxu0
    %470 = vst [vmem:[#allocation10] sm:$0xff] %v468
    // Predicated region
    $region46: #{tpu_custom_call.1} parent=1 // pred_check
      _
    $region47: #{tpu_custom_call.1} parent=1 // pred_check_branch
      %472 = sbr.rel (0) target = $region49
    $region48: #{tpu_custom_call.1} parent=1 // pred_region
      %474 = vsyncadd [#allocation4], 0
      %s476 = sshll.u32 [#allocation10], 4
      %s477 = int_to_ptr.vmem [resolvable:$true] %s476
      %s478 = sshll.u32 %s7, 4
      %s479 = int_to_ptr.hbm [resolvable:$true] %s478
      %481 = dma.vmem_to_hbm [thread:$0]  %s477, 128, %s479, [#allocation4]
    $region49: #{tpu_custom_call.1} parent=1 // pred_fallthru
      _
    // Predicated region
    $region50: #{tpu_custom_call.1} parent=1 // pred_check
      _
    $region51: #{tpu_custom_call.1} parent=1 // pred_check_branch
      %483 = sbr.rel (0) target = $region53
    $region52: #{tpu_custom_call.1} parent=1 // pred_region
      %485 = dma.done [#allocation4], 128
    $region53: #{tpu_custom_call.1} parent=1 // pred_fallthru
      _
    %486 = vsyncpa [#allocation3], 1
    %487 = vsyncpa [#allocation6], 1
    %488 = vsyncpa [#allocation9], 1
    %489 = vsyncpa [#allocation4], 1

</llo_original>
